<compile_context>
chip_gen: v7x
topology: tpu7x:2x2x1
jax: 0.10.0
libtpu: 0.0.40
codegen_flags: <defaults>
</compile_context>

<pallas_src>
import functools

import jax
import jax.numpy as jnp
from jax.experimental import pallas as pl
from jax.experimental.pallas import tpu as pltpu

# ----------------------------- configuration -----------------------------
IN_DIM = 32          # in_dim
DIM_ENC = 64         # dim_encoder
DIM_ENC_OUT = 16     # dim_encoder_out
N_RES_LAYERS = 2     # n_res_layers (shared weights, see note above)
NORM = True          # norm=True -> Linear + LayerNorm + ReLU in the res block
LN_EPS = 1e-5

BATCH = 64           # number of rows in the demo
MAX_TILE_M = 2048    # batch-tile cap for large N (DMA per step still < 1 MB)


# ------------------------------- kernel ----------------------------------
def encoder_kernel(x_ref, q_ref,
                   w_in_ref, b_in_ref,
                   w_res_ref, b_res_ref, ln_g_ref, ln_b_ref,
                   w_out_ref, b_out_ref,
                   o_ref,
                   *, n_res_layers, norm):
    d_enc = w_in_ref.shape[1]

    x = x_ref[...].astype(jnp.float32)
    q = q_ref[...].astype(jnp.float32)

    # (1, D) params used directly: Mosaic keeps them as single replicated
    # vregs and sublane-broadcasts at the add/mul sites.  No (tile_m, D)
    # materialization -> no extra vector-store traffic, no spills.
    b_in = b_in_ref[...]
    b_res = b_res_ref[...]
    b_out = b_out_ref[...]
    if norm:
        ln_g = ln_g_ref[...]
        ln_b = ln_b_ref[...]

    w_res = w_res_ref[...]
    inv_d = jnp.float32(1.0 / d_enc)

    # weight_in
    h = jnp.dot(x, w_in_ref[...], preferred_element_type=jnp.float32) + b_in

    # Shared residual block applied n_res_layers times, then * q_embedding.
    for _ in range(n_res_layers):
        z = jnp.dot(h, w_res, preferred_element_type=jnp.float32) + b_res
        if norm:
            # One-pass statistics (independent sum / sum-of-squares
            # reductions); clamp guards the rsqrt against catastrophic
            # cancellation when |mean| >> std.
            mu = jnp.sum(z, axis=-1, keepdims=True) * inv_d
            ex2 = jnp.sum(z * z, axis=-1, keepdims=True) * inv_d
            var = jnp.maximum(ex2 - mu * mu, 0.0)
            z = (z - mu) * jax.lax.rsqrt(var + LN_EPS)
            z = z * ln_g + ln_b
        h = h + jnp.maximum(z, 0.0)   # identity + ReLU(res)
        h = h * q                     # x = x * q_embedding

    # out projection
    out = jnp.dot(h, w_out_ref[...], preferred_element_type=jnp.float32) + b_out
    o_ref[...] = out.astype(o_ref.dtype)


# ------------------------------ wrapper -----------------------------------
def _pick_tile_m(n_rows):
    """>= 2 parallel tiles whenever the batch allows (v7x 2nd TC), capped."""
    if n_rows <= 8:
        return max(n_rows, 1)
    tile = ((n_rows // 2) // 8) * 8
    return max(8, min(MAX_TILE_M, tile))


def encoder_forward(x, q_embedding, params, *, n_res_layers=N_RES_LAYERS,
                    norm=NORM, tile_m=None):
    N, in_dim = x.shape
    d_enc = params["w_in"].shape[1]
    d_out = params["w_out"].shape[1]

    if tile_m is None:
        tile_m = _pick_tile_m(N)

    # Pad the batch so tile_m divides it; padded rows are computed on zeros
    # and sliced away after the call (robust for arbitrary N).
    n_tiles = pl.cdiv(N, tile_m)
    padded_n = n_tiles * tile_m
    if padded_n != N:
        pad = padded_n - N
        x = jnp.pad(x, ((0, pad), (0, 0)))
        q_embedding = jnp.pad(q_embedding, ((0, pad), (0, 0)))

    kernel = functools.partial(encoder_kernel, n_res_layers=n_res_layers, norm=norm)

    # Whole-array blocks for the (small) weights/params: block index never
    # changes across the grid so Pallas keeps them resident in VMEM.
    full = lambda arr: pl.BlockSpec(arr.shape, lambda i: (0, 0))

    # Advisory cost estimate so XLA schedules this small call sensibly.
    flops = 2 * N * (in_dim * d_enc
                     + n_res_layers * d_enc * d_enc
                     + d_enc * d_out) + 10 * N * d_enc * n_res_layers
    bytes_accessed = 4 * (N * (in_dim + d_enc + d_out)
                          + in_dim * d_enc + d_enc
                          + d_enc * d_enc + 3 * d_enc
                          + d_enc * d_out + d_out)
    transcendentals = N * n_res_layers  # one rsqrt per row per residual layer

    out = pl.pallas_call(
        kernel,
        out_shape=jax.ShapeDtypeStruct((padded_n, d_out), x.dtype),
        grid_spec=pltpu.PrefetchScalarGridSpec(
            num_scalar_prefetch=0,
            grid=(n_tiles,),
            in_specs=[
                pl.BlockSpec((tile_m, in_dim), lambda i: (i, 0)),   # x tile
                pl.BlockSpec((tile_m, d_enc), lambda i: (i, 0)),    # q_embedding tile
                full(params["w_in"]), full(params["b_in"]),
                full(params["w_res"]), full(params["b_res"]),
                full(params["ln_g"]), full(params["ln_b"]),
                full(params["w_out"]), full(params["b_out"]),
            ],
            out_specs=pl.BlockSpec((tile_m, d_out), lambda i: (i, 0)),
        ),
        compiler_params=pltpu.CompilerParams(
            dimension_semantics=("parallel",)),
        cost_estimate=pl.CostEstimate(
            flops=int(flops),
            transcendentals=int(transcendentals),
            bytes_accessed=int(bytes_accessed)),
    )(x, q_embedding,
      params["w_in"], params["b_in"],
      params["w_res"], params["b_res"], params["ln_g"], params["ln_b"],
      params["w_out"], params["b_out"])

    return out[:N] if padded_n != N else out


# ----------------------- pure-JAX reference (for check) --------------------
def encoder_ref(x, q, p, *, n_res_layers=N_RES_LAYERS, norm=NORM):
    h = x @ p["w_in"] + p["b_in"]
    for _ in range(n_res_layers):
        z = h @ p["w_res"] + p["b_res"]
        if norm:
            mu = jnp.mean(z, -1, keepdims=True)
            var = jnp.mean((z - mu) ** 2, -1, keepdims=True)
            z = (z - mu) / jnp.sqrt(var + LN_EPS)
            z = z * p["ln_g"] + p["ln_b"]
        h = h + jnp.maximum(z, 0.0)
        h = h * q
    return h @ p["w_out"] + p["b_out"]


# ------------------------------ main ---------------------------------------
if __name__ == "__main__":
    key = jax.random.PRNGKey(0)
    ks = jax.random.split(key, 10)

    # Deterministic synthetic parameters (weights stored as (in, out)).
    params = {
        "w_in":  (jax.random.normal(ks[0], (IN_DIM, DIM_ENC), jnp.float32)
                  * (1.0 / jnp.sqrt(IN_DIM))),
        "b_in":  jax.random.normal(ks[1], (1, DIM_ENC), jnp.float32) * 0.01,
        "w_res": (jax.random.normal(ks[2], (DIM_ENC, DIM_ENC), jnp.float32)
                  * (1.0 / jnp.sqrt(DIM_ENC))),
        "b_res": jax.random.normal(ks[3], (1, DIM_ENC), jnp.float32) * 0.01,
        "ln_g":  jnp.ones((1, DIM_ENC), jnp.float32),
        "ln_b":  jnp.zeros((1, DIM_ENC), jnp.float32),
        "w_out": (jax.random.normal(ks[4], (DIM_ENC, DIM_ENC_OUT), jnp.float32)
                  * (1.0 / jnp.sqrt(DIM_ENC))),
        "b_out": jax.random.normal(ks[5], (1, DIM_ENC_OUT), jnp.float32) * 0.01,
    }

    x = jax.random.normal(ks[6], (BATCH, IN_DIM), jnp.float32)
    # q_embedding broadcasts against the hidden activations (per-row embedding).
    q_embedding = jax.random.normal(ks[7], (BATCH, DIM_ENC), jnp.float32)

    out = encoder_forward(x, q_embedding, params)   # BATCH=64 -> grid=(2,)
    out = jax.block_until_ready(out)

    ref = encoder_ref(x, q_embedding, params)
    assert out.shape == (BATCH, DIM_ENC_OUT)
    assert jnp.allclose(out, ref, atol=1e-4, rtol=1e-4), "mismatch vs reference"

    print("KERNEL_OK")
</pallas_src>

<mosaic_0001>
module attributes {stable_mosaic.version = 11 : i64} {
  func.func @encoder_kernel(%arg0: i32, %arg1: memref<32x32xf32, #tpu.memory_space<vmem>>, %arg2: memref<32x64xf32, #tpu.memory_space<vmem>>, %arg3: memref<32x64xf32, #tpu.memory_space<vmem>>, %arg4: memref<1x64xf32, #tpu.memory_space<vmem>>, %arg5: memref<64x64xf32, #tpu.memory_space<vmem>>, %arg6: memref<1x64xf32, #tpu.memory_space<vmem>>, %arg7: memref<1x64xf32, #tpu.memory_space<vmem>>, %arg8: memref<1x64xf32, #tpu.memory_space<vmem>>, %arg9: memref<64x16xf32, #tpu.memory_space<vmem>>, %arg10: memref<1x16xf32, #tpu.memory_space<vmem>>, %arg11: memref<32x16xf32, #tpu.memory_space<vmem>>) attributes {dimension_semantics = [#tpu.dimension_semantics<parallel>], iteration_bounds = array<i64: 2>, scalar_prefetch = 0 : i64, scratch_operands = 0 : i64, tpu.core_type = #tpu.core_type<tc>, window_params = [{transform_indices = @transform_0, window_bounds = array<i64: 32, 32>}, {transform_indices = @transform_1, window_bounds = array<i64: 32, 64>}, {pipeline_mode = #tpu.pipeline_mode<synchronous>, transform_indices = @transform_2, window_bounds = array<i64: 32, 64>}, {pipeline_mode = #tpu.pipeline_mode<synchronous>, transform_indices = @transform_3, window_bounds = array<i64: 1, 64>}, {pipeline_mode = #tpu.pipeline_mode<synchronous>, transform_indices = @transform_4, window_bounds = array<i64: 64, 64>}, {pipeline_mode = #tpu.pipeline_mode<synchronous>, transform_indices = @transform_5, window_bounds = array<i64: 1, 64>}, {pipeline_mode = #tpu.pipeline_mode<synchronous>, transform_indices = @transform_6, window_bounds = array<i64: 1, 64>}, {pipeline_mode = #tpu.pipeline_mode<synchronous>, transform_indices = @transform_7, window_bounds = array<i64: 1, 64>}, {pipeline_mode = #tpu.pipeline_mode<synchronous>, transform_indices = @transform_8, window_bounds = array<i64: 64, 16>}, {pipeline_mode = #tpu.pipeline_mode<synchronous>, transform_indices = @transform_9, window_bounds = array<i64: 1, 16>}, {transform_indices = @transform_10, window_bounds = array<i64: 32, 16>}]} {
    %c0 = arith.constant 0 : index
    %c0_0 = arith.constant 0 : index
    %0 = vector.load %arg1[%c0, %c0_0] : memref<32x32xf32, #tpu.memory_space<vmem>>, vector<32x32xf32>
    %c0_1 = arith.constant 0 : index
    %c0_2 = arith.constant 0 : index
    %1 = vector.load %arg2[%c0_1, %c0_2] : memref<32x64xf32, #tpu.memory_space<vmem>>, vector<32x64xf32>
    %c0_3 = arith.constant 0 : index
    %c0_4 = arith.constant 0 : index
    %2 = vector.load %arg4[%c0_3, %c0_4] : memref<1x64xf32, #tpu.memory_space<vmem>>, vector<1x64xf32>
    %c0_5 = arith.constant 0 : index
    %c0_6 = arith.constant 0 : index
    %3 = vector.load %arg6[%c0_5, %c0_6] : memref<1x64xf32, #tpu.memory_space<vmem>>, vector<1x64xf32>
    %c0_7 = arith.constant 0 : index
    %c0_8 = arith.constant 0 : index
    %4 = vector.load %arg10[%c0_7, %c0_8] : memref<1x16xf32, #tpu.memory_space<vmem>>, vector<1x16xf32>
    %c0_9 = arith.constant 0 : index
    %c0_10 = arith.constant 0 : index
    %5 = vector.load %arg7[%c0_9, %c0_10] : memref<1x64xf32, #tpu.memory_space<vmem>>, vector<1x64xf32>
    %c0_11 = arith.constant 0 : index
    %c0_12 = arith.constant 0 : index
    %6 = vector.load %arg8[%c0_11, %c0_12] : memref<1x64xf32, #tpu.memory_space<vmem>>, vector<1x64xf32>
    %c0_13 = arith.constant 0 : index
    %c0_14 = arith.constant 0 : index
    %7 = vector.load %arg5[%c0_13, %c0_14] : memref<64x64xf32, #tpu.memory_space<vmem>>, vector<64x64xf32>
    %c0_15 = arith.constant 0 : index
    %c0_16 = arith.constant 0 : index
    %8 = vector.load %arg3[%c0_15, %c0_16] : memref<32x64xf32, #tpu.memory_space<vmem>>, vector<32x64xf32>
    %cst = arith.constant dense<0.000000e+00> : vector<32x64xf32>
    %9 = tpu.matmul %0, %8, %cst {dimension_numbers = #tpu.dot_dimension_numbers<[1], [0], [0], [1], [0, 0, 1, 1], [], []>} : vector<32x32xf32>, vector<32x64xf32>, vector<32x64xf32> -> vector<32x64xf32>
    %10 = vector.broadcast %2 : vector<1x64xf32> to vector<32x64xf32>
    %11 = arith.addf %9, %10 : vector<32x64xf32>
    %cst_17 = arith.constant dense<0.000000e+00> : vector<32x64xf32>
    %12 = tpu.matmul %11, %7, %cst_17 {dimension_numbers = #tpu.dot_dimension_numbers<[1], [0], [0], [1], [0, 0, 1, 1], [], []>} : vector<32x64xf32>, vector<64x64xf32>, vector<32x64xf32> -> vector<32x64xf32>
    %13 = vector.broadcast %3 : vector<1x64xf32> to vector<32x64xf32>
    %14 = arith.addf %12, %13 : vector<32x64xf32>
    %cst_18 = arith.constant dense<0.000000e+00> : vector<32xf32>
    %15 = vector.multi_reduction <add>, %14, %cst_18 [1] : vector<32x64xf32> to vector<32xf32>
    %16 = vector.shape_cast %15 : vector<32xf32> to vector<32x1xf32>
    %cst_19 = arith.constant 1.562500e-02 : f32
    %17 = vector.broadcast %cst_19 : f32 to vector<32x1xf32>
    %18 = arith.mulf %16, %17 : vector<32x1xf32>
    %19 = arith.mulf %14, %14 : vector<32x64xf32>
    %cst_20 = arith.constant dense<0.000000e+00> : vector<32xf32>
    %20 = vector.multi_reduction <add>, %19, %cst_20 [1] : vector<32x64xf32> to vector<32xf32>
    %21 = vector.shape_cast %20 : vector<32xf32> to vector<32x1xf32>
    %cst_21 = arith.constant 1.562500e-02 : f32
    %22 = vector.broadcast %cst_21 : f32 to vector<32x1xf32>
    %23 = arith.mulf %21, %22 : vector<32x1xf32>
    %24 = arith.mulf %18, %18 : vector<32x1xf32>
    %25 = arith.subf %23, %24 : vector<32x1xf32>
    %cst_22 = arith.constant 0.000000e+00 : f32
    %26 = vector.broadcast %cst_22 : f32 to vector<32x1xf32>
    %27 = arith.maximumf %25, %26 : vector<32x1xf32>
    %28 = vector.broadcast %18 : vector<32x1xf32> to vector<32x64xf32>
    %29 = arith.subf %14, %28 : vector<32x64xf32>
    %cst_23 = arith.constant 9.99999974E-6 : f32
    %30 = vector.broadcast %cst_23 : f32 to vector<32x1xf32>
    %31 = arith.addf %27, %30 : vector<32x1xf32>
    %32 = math.rsqrt %31 : vector<32x1xf32>
    %33 = vector.broadcast %32 : vector<32x1xf32> to vector<32x64xf32>
    %34 = arith.mulf %29, %33 : vector<32x64xf32>
    %35 = vector.broadcast %5 : vector<1x64xf32> to vector<32x64xf32>
    %36 = arith.mulf %34, %35 : vector<32x64xf32>
    %37 = vector.broadcast %6 : vector<1x64xf32> to vector<32x64xf32>
    %38 = arith.addf %36, %37 : vector<32x64xf32>
    %cst_24 = arith.constant 0.000000e+00 : f32
    %39 = vector.broadcast %cst_24 : f32 to vector<32x64xf32>
    %40 = arith.maximumf %38, %39 : vector<32x64xf32>
    %41 = arith.addf %11, %40 : vector<32x64xf32>
    %42 = arith.mulf %41, %1 : vector<32x64xf32>
    %cst_25 = arith.constant dense<0.000000e+00> : vector<32x64xf32>
    %43 = tpu.matmul %42, %7, %cst_25 {dimension_numbers = #tpu.dot_dimension_numbers<[1], [0], [0], [1], [0, 0, 1, 1], [], []>} : vector<32x64xf32>, vector<64x64xf32>, vector<32x64xf32> -> vector<32x64xf32>
    %44 = vector.broadcast %3 : vector<1x64xf32> to vector<32x64xf32>
    %45 = arith.addf %43, %44 : vector<32x64xf32>
    %cst_26 = arith.constant dense<0.000000e+00> : vector<32xf32>
    %46 = vector.multi_reduction <add>, %45, %cst_26 [1] : vector<32x64xf32> to vector<32xf32>
    %47 = vector.shape_cast %46 : vector<32xf32> to vector<32x1xf32>
    %cst_27 = arith.constant 1.562500e-02 : f32
    %48 = vector.broadcast %cst_27 : f32 to vector<32x1xf32>
    %49 = arith.mulf %47, %48 : vector<32x1xf32>
    %50 = arith.mulf %45, %45 : vector<32x64xf32>
    %cst_28 = arith.constant dense<0.000000e+00> : vector<32xf32>
    %51 = vector.multi_reduction <add>, %50, %cst_28 [1] : vector<32x64xf32> to vector<32xf32>
    %52 = vector.shape_cast %51 : vector<32xf32> to vector<32x1xf32>
    %cst_29 = arith.constant 1.562500e-02 : f32
    %53 = vector.broadcast %cst_29 : f32 to vector<32x1xf32>
    %54 = arith.mulf %52, %53 : vector<32x1xf32>
    %55 = arith.mulf %49, %49 : vector<32x1xf32>
    %56 = arith.subf %54, %55 : vector<32x1xf32>
    %cst_30 = arith.constant 0.000000e+00 : f32
    %57 = vector.broadcast %cst_30 : f32 to vector<32x1xf32>
    %58 = arith.maximumf %56, %57 : vector<32x1xf32>
    %59 = vector.broadcast %49 : vector<32x1xf32> to vector<32x64xf32>
    %60 = arith.subf %45, %59 : vector<32x64xf32>
    %cst_31 = arith.constant 9.99999974E-6 : f32
    %61 = vector.broadcast %cst_31 : f32 to vector<32x1xf32>
    %62 = arith.addf %58, %61 : vector<32x1xf32>
    %63 = math.rsqrt %62 : vector<32x1xf32>
    %64 = vector.broadcast %63 : vector<32x1xf32> to vector<32x64xf32>
    %65 = arith.mulf %60, %64 : vector<32x64xf32>
    %66 = vector.broadcast %5 : vector<1x64xf32> to vector<32x64xf32>
    %67 = arith.mulf %65, %66 : vector<32x64xf32>
    %68 = vector.broadcast %6 : vector<1x64xf32> to vector<32x64xf32>
    %69 = arith.addf %67, %68 : vector<32x64xf32>
    %cst_32 = arith.constant 0.000000e+00 : f32
    %70 = vector.broadcast %cst_32 : f32 to vector<32x64xf32>
    %71 = arith.maximumf %69, %70 : vector<32x64xf32>
    %72 = arith.addf %42, %71 : vector<32x64xf32>
    %73 = arith.mulf %72, %1 : vector<32x64xf32>
    %c0_33 = arith.constant 0 : index
    %c0_34 = arith.constant 0 : index
    %74 = vector.load %arg9[%c0_33, %c0_34] : memref<64x16xf32, #tpu.memory_space<vmem>>, vector<64x16xf32>
    %cst_35 = arith.constant dense<0.000000e+00> : vector<32x16xf32>
    %75 = tpu.matmul %73, %74, %cst_35 {dimension_numbers = #tpu.dot_dimension_numbers<[1], [0], [0], [1], [0, 0, 1, 1], [], []>} : vector<32x64xf32>, vector<64x16xf32>, vector<32x16xf32> -> vector<32x16xf32>
    %76 = vector.broadcast %4 : vector<1x16xf32> to vector<32x16xf32>
    %77 = arith.addf %75, %76 : vector<32x16xf32>
    %c0_36 = arith.constant 0 : index
    %c0_37 = arith.constant 0 : index
    %78 = vector.load %arg11[%c0_36, %c0_37] : memref<32x16xf32, #tpu.memory_space<vmem>>, vector<32x16xf32>
    tpu.vector_store %arg11[%c0_36, %c0_37], %77 {strides = array<i32>} : memref<32x16xf32, #tpu.memory_space<vmem>>, vector<32x16xf32>,
    return
  }
  func.func @transform_0(%arg0: i32) -> (i32, i32) {
    %c0_i32 = arith.constant 0 : i32
    %c0_i32_0 = arith.constant 0 : i32
    return %arg0, %c0_i32 : i32, i32
  }
  func.func @transform_1(%arg0: i32) -> (i32, i32) {
    %c0_i32 = arith.constant 0 : i32
    %c0_i32_0 = arith.constant 0 : i32
    return %arg0, %c0_i32 : i32, i32
  }
  func.func @transform_2(%arg0: i32) -> (i32, i32) {
    %c0_i32 = arith.constant 0 : i32
    %c0_i32_0 = arith.constant 0 : i32
    %c0_i32_1 = arith.constant 0 : i32
    return %c0_i32, %c0_i32_0 : i32, i32
  }
  func.func @transform_3(%arg0: i32) -> (i32, i32) {
    %c0_i32 = arith.constant 0 : i32
    %c0_i32_0 = arith.constant 0 : i32
    %c0_i32_1 = arith.constant 0 : i32
    return %c0_i32, %c0_i32_0 : i32, i32
  }
  func.func @transform_4(%arg0: i32) -> (i32, i32) {
    %c0_i32 = arith.constant 0 : i32
    %c0_i32_0 = arith.constant 0 : i32
    %c0_i32_1 = arith.constant 0 : i32
    return %c0_i32, %c0_i32_0 : i32, i32
  }
  func.func @transform_5(%arg0: i32) -> (i32, i32) {
    %c0_i32 = arith.constant 0 : i32
    %c0_i32_0 = arith.constant 0 : i32
    %c0_i32_1 = arith.constant 0 : i32
    return %c0_i32, %c0_i32_0 : i32, i32
  }
  func.func @transform_6(%arg0: i32) -> (i32, i32) {
    %c0_i32 = arith.constant 0 : i32
    %c0_i32_0 = arith.constant 0 : i32
    %c0_i32_1 = arith.constant 0 : i32
    return %c0_i32, %c0_i32_0 : i32, i32
  }
  func.func @transform_7(%arg0: i32) -> (i32, i32) {
    %c0_i32 = arith.constant 0 : i32
    %c0_i32_0 = arith.constant 0 : i32
    %c0_i32_1 = arith.constant 0 : i32
    return %c0_i32, %c0_i32_0 : i32, i32
  }
  func.func @transform_8(%arg0: i32) -> (i32, i32) {
    %c0_i32 = arith.constant 0 : i32
    %c0_i32_0 = arith.constant 0 : i32
    %c0_i32_1 = arith.constant 0 : i32
    return %c0_i32, %c0_i32_0 : i32, i32
  }
  func.func @transform_9(%arg0: i32) -> (i32, i32) {
    %c0_i32 = arith.constant 0 : i32
    %c0_i32_0 = arith.constant 0 : i32
    %c0_i32_1 = arith.constant 0 : i32
    return %c0_i32, %c0_i32_0 : i32, i32
  }
  func.func @transform_10(%arg0: i32) -> (i32, i32) {
    %c0_i32 = arith.constant 0 : i32
    %c0_i32_0 = arith.constant 0 : i32
    return %arg0, %c0_i32 : i32, i32
  }
}

</mosaic_0001>

<llo_original>
// kernel: tpu_custom_call.1
$region0: #{tpu_custom_call.1}
  #allocation0 [shape = 'u32[]', space=smem, size = 0x4, offset = 0x4, fixed_abs, tag = 'smem constant byte address 0x4 - core index']
  #allocation1 [shape = 'u32[144,128]{1,0:T(1,128)}', space=vmem, size = 0x12000, scoped, tag = 'internal scratch']
  %s0 = inlined_call_operand.vmem [shape: f32[64,32], index: 0, kind: input, shape index: {}]
  %s1 = inlined_call_operand.vmem [shape: f32[64,64], index: 1, kind: input, shape index: {}]
  %s2 = inlined_call_operand.vmem [shape: f32[32,64], index: 2, kind: input, shape index: {}]
  %s3 = inlined_call_operand.vmem [shape: f32[1,64], index: 3, kind: input, shape index: {}]
  %s4 = inlined_call_operand.vmem [shape: f32[64,64], index: 4, kind: input, shape index: {}]
  %s5 = inlined_call_operand.vmem [shape: f32[1,64], index: 5, kind: input, shape index: {}]
  %s6 = inlined_call_operand.vmem [shape: f32[1,64], index: 6, kind: input, shape index: {}]
  %s7 = inlined_call_operand.vmem [shape: f32[1,64], index: 7, kind: input, shape index: {}]
  %s8 = inlined_call_operand.vmem [shape: f32[64,16], index: 8, kind: input, shape index: {}]
  %s9 = inlined_call_operand.vmem [shape: f32[1,16], index: 9, kind: input, shape index: {}]
  %s10 = inlined_call_operand.vmem [shape: f32[64,16], index: 10, kind: output, shape index: {}]
  %s11 = sld [smem:[#allocation0]]
  $region73: #{tpu_custom_call.1} parent=0
    _
  %s13 = ssub.s32 1, %s11
  %s14 = scalar_select 0, %s13, %s11
  loop: start=0, step=1, limit=4
  $region2: #{tpu_custom_call.1} parent=0 // loop_pre_header
    _
  $region3: #{tpu_custom_call.1} parent=0 // loop_header
    %s16 = sphi 0, %s20
    %p17 = scmp.ge.s32.totalorder %s16, 4
    %s26 = sphi 0, %s28
    %s29 = sphi 0, %s26
    %s30 = sphi 0, %s29
    %s46 = sphi 0, %s30
    %s52 = sphi 0, %s54
    %s55 = sphi 0, %s52
    %s56 = sphi 0, %s55
    %s72 = sphi 0, %s56
    %s76 = sphi 0, %s76
    %s78 = sphi 0, %s76
    %s79 = sphi 0, %s78
    %s93 = sphi 0, %s79
    %s97 = sphi 0, %s97
    %s99 = sphi 0, %s97
    %s100 = sphi 0, %s99
    %s114 = sphi 0, %s100
    %s118 = sphi 0, %s118
    %s120 = sphi 0, %s118
    %s121 = sphi 0, %s120
    %s135 = sphi 0, %s121
    %s139 = sphi 0, %s139
    %s141 = sphi 0, %s139
    %s142 = sphi 0, %s141
    %s156 = sphi 0, %s142
    %s160 = sphi 0, %s160
    %s162 = sphi 0, %s160
    %s163 = sphi 0, %s162
    %s177 = sphi 0, %s163
    %s181 = sphi 0, %s181
    %s183 = sphi 0, %s181
    %s184 = sphi 0, %s183
    %s198 = sphi 0, %s184
    %s202 = sphi 0, %s202
    %s204 = sphi 0, %s202
    %s205 = sphi 0, %s204
    %s219 = sphi 0, %s205
    %s223 = sphi 0, %s223
    %s225 = sphi 0, %s223
    %s226 = sphi 0, %s225
    %s240 = sphi 0, %s226
    %s246 = sphi 0, %s248
    %s249 = sphi 0, %s246
    %s250 = sphi 0, %s249
    %s266 = sphi 0, %s250
  $region4: #{tpu_custom_call.1} parent=0 // loop_header_branch
    %19 = sbr.rel (%p17) target = $region8
  $region5: #{tpu_custom_call.1} parent=0 // loop_body
    %s21 = ssub.s32 %s16, 1
    %s22 = ssub.s32 %s16, 2
    %s23 = sadd.s32 %s16, 1
    %s24 = ssub.s32 %s16, %s23
    %p25 = scmp.eq.s32.totalorder %s24, 0
    %s27 = sadd.s32 %s26, 1
    %s28 = scalar_select %p25, %s26, %s27
    %p31 = pneg %p25
    %p32 = scmp.eq.s32.totalorder %s16, 1
    %p33 = por %p31, %p32
    %p34 = scmp.ne.s32.totalorder %s26, %s29
    %p35 = scmp.eq.s32.totalorder %s16, 0
    %p36 = por %p34, %p35
    %p37 = scmp.ne.s32.totalorder %s26, %s29
    %p38 = scmp.eq.s32.totalorder %s21, 1
    %p39 = por %p37, %p38
    %p40 = scmp.ne.s32.totalorder %s29, %s30
    %p41 = scmp.eq.s32.totalorder %s21, 0
    %p42 = por %p40, %p41
    %p43 = scmp.ne.s32.totalorder %s29, %s30
    %p44 = scmp.eq.s32.totalorder %s22, 1
    %p45 = por %p43, %p44
    %p47 = scmp.ne.s32.totalorder %s30, %s46
    %p48 = scmp.eq.s32.totalorder %s22, 0
    %p49 = por %p47, %p48
    %s50 = ssub.s32 %s16, %s23
    %p51 = scmp.eq.s32.totalorder %s50, 0
    %s53 = sadd.s32 %s52, 1
    %s54 = scalar_select %p51, %s52, %s53
    %p57 = pneg %p51
    %p58 = scmp.eq.s32.totalorder %s16, 1
    %p59 = por %p57, %p58
    %p60 = scmp.ne.s32.totalorder %s52, %s55
    %p61 = scmp.eq.s32.totalorder %s16, 0
    %p62 = por %p60, %p61
    %p63 = scmp.ne.s32.totalorder %s52, %s55
    %p64 = scmp.eq.s32.totalorder %s21, 1
    %p65 = por %p63, %p64
    %p66 = scmp.ne.s32.totalorder %s55, %s56
    %p67 = scmp.eq.s32.totalorder %s21, 0
    %p68 = por %p66, %p67
    %p69 = scmp.ne.s32.totalorder %s55, %s56
    %p70 = scmp.eq.s32.totalorder %s22, 1
    %p71 = por %p69, %p70
    %p73 = scmp.ne.s32.totalorder %s56, %s72
    %p74 = scmp.eq.s32.totalorder %s22, 0
    %p75 = por %p73, %p74
    %s77 = sadd.s32 %s76, 1
    %p80 = scmp.eq.s32.totalorder %s16, 1
    %p81 = scmp.ne.s32.totalorder %s76, %s78
    %p82 = scmp.eq.s32.totalorder %s16, 0
    %p83 = por %p81, %p82
    %p84 = scmp.ne.s32.totalorder %s76, %s78
    %p85 = scmp.eq.s32.totalorder %s21, 1
    %p86 = por %p84, %p85
    %p87 = scmp.ne.s32.totalorder %s78, %s79
    %p88 = scmp.eq.s32.totalorder %s21, 0
    %p89 = por %p87, %p88
    %p90 = scmp.ne.s32.totalorder %s78, %s79
    %p91 = scmp.eq.s32.totalorder %s22, 1
    %p92 = por %p90, %p91
    %p94 = scmp.ne.s32.totalorder %s79, %s93
    %p95 = scmp.eq.s32.totalorder %s22, 0
    %p96 = por %p94, %p95
    %s98 = sadd.s32 %s97, 1
    %p101 = scmp.eq.s32.totalorder %s16, 1
    %p102 = scmp.ne.s32.totalorder %s97, %s99
    %p103 = scmp.eq.s32.totalorder %s16, 0
    %p104 = por %p102, %p103
    %p105 = scmp.ne.s32.totalorder %s97, %s99
    %p106 = scmp.eq.s32.totalorder %s21, 1
    %p107 = por %p105, %p106
    %p108 = scmp.ne.s32.totalorder %s99, %s100
    %p109 = scmp.eq.s32.totalorder %s21, 0
    %p110 = por %p108, %p109
    %p111 = scmp.ne.s32.totalorder %s99, %s100
    %p112 = scmp.eq.s32.totalorder %s22, 1
    %p113 = por %p111, %p112
    %p115 = scmp.ne.s32.totalorder %s100, %s114
    %p116 = scmp.eq.s32.totalorder %s22, 0
    %p117 = por %p115, %p116
    %s119 = sadd.s32 %s118, 1
    %p122 = scmp.eq.s32.totalorder %s16, 1
    %p123 = scmp.ne.s32.totalorder %s118, %s120
    %p124 = scmp.eq.s32.totalorder %s16, 0
    %p125 = por %p123, %p124
    %p126 = scmp.ne.s32.totalorder %s118, %s120
    %p127 = scmp.eq.s32.totalorder %s21, 1
    %p128 = por %p126, %p127
    %p129 = scmp.ne.s32.totalorder %s120, %s121
    %p130 = scmp.eq.s32.totalorder %s21, 0
    %p131 = por %p129, %p130
    %p132 = scmp.ne.s32.totalorder %s120, %s121
    %p133 = scmp.eq.s32.totalorder %s22, 1
    %p134 = por %p132, %p133
    %p136 = scmp.ne.s32.totalorder %s121, %s135
    %p137 = scmp.eq.s32.totalorder %s22, 0
    %p138 = por %p136, %p137
    %s140 = sadd.s32 %s139, 1
    %p143 = scmp.eq.s32.totalorder %s16, 1
    %p144 = scmp.ne.s32.totalorder %s139, %s141
    %p145 = scmp.eq.s32.totalorder %s16, 0
    %p146 = por %p144, %p145
    %p147 = scmp.ne.s32.totalorder %s139, %s141
    %p148 = scmp.eq.s32.totalorder %s21, 1
    %p149 = por %p147, %p148
    %p150 = scmp.ne.s32.totalorder %s141, %s142
    %p151 = scmp.eq.s32.totalorder %s21, 0
    %p152 = por %p150, %p151
    %p153 = scmp.ne.s32.totalorder %s141, %s142
    %p154 = scmp.eq.s32.totalorder %s22, 1
    %p155 = por %p153, %p154
    %p157 = scmp.ne.s32.totalorder %s142, %s156
    %p158 = scmp.eq.s32.totalorder %s22, 0
    %p159 = por %p157, %p158
    %s161 = sadd.s32 %s160, 1
    %p164 = scmp.eq.s32.totalorder %s16, 1
    %p165 = scmp.ne.s32.totalorder %s160, %s162
    %p166 = scmp.eq.s32.totalorder %s16, 0
    %p167 = por %p165, %p166
    %p168 = scmp.ne.s32.totalorder %s160, %s162
    %p169 = scmp.eq.s32.totalorder %s21, 1
    %p170 = por %p168, %p169
    %p171 = scmp.ne.s32.totalorder %s162, %s163
    %p172 = scmp.eq.s32.totalorder %s21, 0
    %p173 = por %p171, %p172
    %p174 = scmp.ne.s32.totalorder %s162, %s163
    %p175 = scmp.eq.s32.totalorder %s22, 1
    %p176 = por %p174, %p175
    %p178 = scmp.ne.s32.totalorder %s163, %s177
    %p179 = scmp.eq.s32.totalorder %s22, 0
    %p180 = por %p178, %p179
    %s182 = sadd.s32 %s181, 1
    %p185 = scmp.eq.s32.totalorder %s16, 1
    %p186 = scmp.ne.s32.totalorder %s181, %s183
    %p187 = scmp.eq.s32.totalorder %s16, 0
    %p188 = por %p186, %p187
    %p189 = scmp.ne.s32.totalorder %s181, %s183
    %p190 = scmp.eq.s32.totalorder %s21, 1
    %p191 = por %p189, %p190
    %p192 = scmp.ne.s32.totalorder %s183, %s184
    %p193 = scmp.eq.s32.totalorder %s21, 0
    %p194 = por %p192, %p193
    %p195 = scmp.ne.s32.totalorder %s183, %s184
    %p196 = scmp.eq.s32.totalorder %s22, 1
    %p197 = por %p195, %p196
    %p199 = scmp.ne.s32.totalorder %s184, %s198
    %p200 = scmp.eq.s32.totalorder %s22, 0
    %p201 = por %p199, %p200
    %s203 = sadd.s32 %s202, 1
    %p206 = scmp.eq.s32.totalorder %s16, 1
    %p207 = scmp.ne.s32.totalorder %s202, %s204
    %p208 = scmp.eq.s32.totalorder %s16, 0
    %p209 = por %p207, %p208
    %p210 = scmp.ne.s32.totalorder %s202, %s204
    %p211 = scmp.eq.s32.totalorder %s21, 1
    %p212 = por %p210, %p211
    %p213 = scmp.ne.s32.totalorder %s204, %s205
    %p214 = scmp.eq.s32.totalorder %s21, 0
    %p215 = por %p213, %p214
    %p216 = scmp.ne.s32.totalorder %s204, %s205
    %p217 = scmp.eq.s32.totalorder %s22, 1
    %p218 = por %p216, %p217
    %p220 = scmp.ne.s32.totalorder %s205, %s219
    %p221 = scmp.eq.s32.totalorder %s22, 0
    %p222 = por %p220, %p221
    %s224 = sadd.s32 %s223, 1
    %p227 = scmp.eq.s32.totalorder %s16, 1
    %p228 = scmp.ne.s32.totalorder %s223, %s225
    %p229 = scmp.eq.s32.totalorder %s16, 0
    %p230 = por %p228, %p229
    %p231 = scmp.ne.s32.totalorder %s223, %s225
    %p232 = scmp.eq.s32.totalorder %s21, 1
    %p233 = por %p231, %p232
    %p234 = scmp.ne.s32.totalorder %s225, %s226
    %p235 = scmp.eq.s32.totalorder %s21, 0
    %p236 = por %p234, %p235
    %p237 = scmp.ne.s32.totalorder %s225, %s226
    %p238 = scmp.eq.s32.totalorder %s22, 1
    %p239 = por %p237, %p238
    %p241 = scmp.ne.s32.totalorder %s226, %s240
    %p242 = scmp.eq.s32.totalorder %s22, 0
    %p243 = por %p241, %p242
    %s244 = ssub.s32 %s16, %s23
    %p245 = scmp.eq.s32.totalorder %s244, 0
    %s247 = sadd.s32 %s246, 1
    %s248 = scalar_select %p245, %s246, %s247
    %p251 = pneg %p245
    %p252 = scmp.eq.s32.totalorder %s16, 1
    %p253 = por %p251, %p252
    %p254 = scmp.ne.s32.totalorder %s246, %s249
    %p255 = scmp.eq.s32.totalorder %s16, 0
    %p256 = por %p254, %p255
    %p257 = scmp.ne.s32.totalorder %s246, %s249
    %p258 = scmp.eq.s32.totalorder %s21, 1
    %p259 = por %p257, %p258
    %p260 = scmp.ne.s32.totalorder %s249, %s250
    %p261 = scmp.eq.s32.totalorder %s21, 0
    %p262 = por %p260, %p261
    %p263 = scmp.ne.s32.totalorder %s249, %s250
    %p264 = scmp.eq.s32.totalorder %s22, 1
    %p265 = por %p263, %p264
    %p267 = scmp.ne.s32.totalorder %s250, %s266
    %p268 = scmp.eq.s32.totalorder %s22, 0
    %p269 = por %p267, %p268
    %p270 = scmp.le.s32.totalorder 1, %s16
    %p271 = scmp.lt.s32.totalorder %s16, 3
    %p272 = pnand %p270, %p271
    %p273 = pneg %p272
    // Predicated region
    $region9: #{tpu_custom_call.1} parent=5 // pred_check
      _
    $region10: #{tpu_custom_call.1} parent=5 // pred_check_branch
      %275 = sbr.rel (%p272) target = $region12
    $region11: #{tpu_custom_call.1} parent=5 // pred_region
      %s276 = ssub.s32 %s16, 1
      // Predicated region
      $region13: #{tpu_custom_call.1} parent=11 // pred_check
        %p277 = pneg %p89
      $region14: #{tpu_custom_call.1} parent=11 // pred_check_branch
        %279 = sbr.rel (%p277) target = $region16
      $region15: #{tpu_custom_call.1} parent=11 // pred_region
        _
      $region16: #{tpu_custom_call.1} parent=11 // pred_fallthru
        _
      // Predicated region
      $region17: #{tpu_custom_call.1} parent=11 // pred_check
        %p280 = pneg %p110
      $region18: #{tpu_custom_call.1} parent=11 // pred_check_branch
        %282 = sbr.rel (%p280) target = $region20
      $region19: #{tpu_custom_call.1} parent=11 // pred_region
        _
      $region20: #{tpu_custom_call.1} parent=11 // pred_fallthru
        _
      // Predicated region
      $region21: #{tpu_custom_call.1} parent=11 // pred_check
        %p283 = pneg %p131
      $region22: #{tpu_custom_call.1} parent=11 // pred_check_branch
        %285 = sbr.rel (%p283) target = $region24
      $region23: #{tpu_custom_call.1} parent=11 // pred_region
        _
      $region24: #{tpu_custom_call.1} parent=11 // pred_fallthru
        _
      // Predicated region
      $region25: #{tpu_custom_call.1} parent=11 // pred_check
        %p286 = pneg %p152
      $region26: #{tpu_custom_call.1} parent=11 // pred_check_branch
        %288 = sbr.rel (%p286) target = $region28
      $region27: #{tpu_custom_call.1} parent=11 // pred_region
        _
      $region28: #{tpu_custom_call.1} parent=11 // pred_fallthru
        _
      // Predicated region
      $region29: #{tpu_custom_call.1} parent=11 // pred_check
        %p289 = pneg %p173
      $region30: #{tpu_custom_call.1} parent=11 // pred_check_branch
        %291 = sbr.rel (%p289) target = $region32
      $region31: #{tpu_custom_call.1} parent=11 // pred_region
        _
      $region32: #{tpu_custom_call.1} parent=11 // pred_fallthru
        _
      // Predicated region
      $region33: #{tpu_custom_call.1} parent=11 // pred_check
        %p292 = pneg %p194
      $region34: #{tpu_custom_call.1} parent=11 // pred_check_branch
        %294 = sbr.rel (%p292) target = $region36
      $region35: #{tpu_custom_call.1} parent=11 // pred_region
        _
      $region36: #{tpu_custom_call.1} parent=11 // pred_fallthru
        _
      // Predicated region
      $region37: #{tpu_custom_call.1} parent=11 // pred_check
        %p295 = pneg %p215
      $region38: #{tpu_custom_call.1} parent=11 // pred_check_branch
        %297 = sbr.rel (%p295) target = $region40
      $region39: #{tpu_custom_call.1} parent=11 // pred_region
        _
      $region40: #{tpu_custom_call.1} parent=11 // pred_fallthru
        _
      // Predicated region
      $region41: #{tpu_custom_call.1} parent=11 // pred_check
        %p298 = pneg %p236
      $region42: #{tpu_custom_call.1} parent=11 // pred_check_branch
        %300 = sbr.rel (%p298) target = $region44
      $region43: #{tpu_custom_call.1} parent=11 // pred_region
        _
      $region44: #{tpu_custom_call.1} parent=11 // pred_fallthru
        _
    $region12: #{tpu_custom_call.1} parent=5 // pred_fallthru
      _
    %p301 = scmp.lt.s32.totalorder %s16, 2
    // Predicated region
    $region45: #{tpu_custom_call.1} parent=5 // pred_check
      %p302 = pneg %p301
    $region46: #{tpu_custom_call.1} parent=5 // pred_check_branch
      %304 = sbr.rel (%p302) target = $region48
    $region47: #{tpu_custom_call.1} parent=5 // pred_region
      // Predicated region
      $region49: #{tpu_custom_call.1} parent=47 // pred_check
        %p305 = pneg %p36
      $region50: #{tpu_custom_call.1} parent=47 // pred_check_branch
        %307 = sbr.rel (%p305) target = $region52
      $region51: #{tpu_custom_call.1} parent=47 // pred_region
        %s308 = smul.u32 4, %s16
        %p309 = scmp.lt.s32.totalorder %s308, 7
        %s310 = scalar_select %p309, %s308, 7
        %s311 = smul.addr %s310, 8
        %s312 = scalar_lea.vmem %s0, %s311
        %s313 = smul.u32 4, %s16
      $region52: #{tpu_custom_call.1} parent=47 // pred_fallthru
        _
      // Predicated region
      $region53: #{tpu_custom_call.1} parent=47 // pred_check
        %p314 = pneg %p62
      $region54: #{tpu_custom_call.1} parent=47 // pred_check_branch
        %316 = sbr.rel (%p314) target = $region56
      $region55: #{tpu_custom_call.1} parent=47 // pred_region
        %s317 = smul.u32 4, %s16
        %p318 = scmp.lt.s32.totalorder %s317, 7
        %s319 = scalar_select %p318, %s317, 7
        %s320 = smul.addr %s319, 8
        %s321 = scalar_lea.vmem %s1, %s320
        %s322 = smul.u32 4, %s16
      $region56: #{tpu_custom_call.1} parent=47 // pred_fallthru
        _
    $region48: #{tpu_custom_call.1} parent=5 // pred_fallthru
      _
    %p323 = scmp.le.s32.totalorder 1, %s16
    %p324 = scmp.lt.s32.totalorder %s16, 3
    %p325 = pnand %p323, %p324
    %p326 = pneg %p325
    // Predicated region
    $region57: #{tpu_custom_call.1} parent=5 // pred_check
      _
    $region58: #{tpu_custom_call.1} parent=5 // pred_check_branch
      %328 = sbr.rel (%p325) target = $region60
    $region59: #{tpu_custom_call.1} parent=5 // pred_region
      %s329 = ssub.s32 %s16, 1
      %s330 = smul.u32 4, %s21
      %p331 = scmp.lt.s32.totalorder %s330, 7
      %s332 = scalar_select %p331, %s330, 7
      %s333 = smul.addr %s332, 8
      %s334 = scalar_lea.vmem %s0, %s333
      %p335 = pneg %p42
      %p336 = pneg %p39
      %s337 = smul.u32 4, %s21
      %p338 = scmp.lt.s32.totalorder %s337, 7
      %s339 = scalar_select %p338, %s337, 7
      %s340 = smul.addr %s339, 8
      %s341 = scalar_lea.vmem %s1, %s340
      %p342 = pneg %p68
      %p343 = pneg %p65
      %p344 = pneg %p89
      %p345 = pneg %p86
      %p346 = pneg %p110
      %p347 = pneg %p107
      %p348 = pneg %p131
      %p349 = pneg %p128
      %p350 = pneg %p152
      %p351 = pneg %p149
      %p352 = pneg %p173
      %p353 = pneg %p170
      %p354 = pneg %p194
      %p355 = pneg %p191
      %p356 = pneg %p215
      %p357 = pneg %p212
      %p358 = pneg %p236
      %p359 = pneg %p233
      %p360 = pneg %p262
      %p361 = pneg %p259
      %s362 = smul.u32 4, %s21
      %p363 = scmp.lt.s32.totalorder %s362, 7
      %s364 = scalar_select %p363, %s362, 7
      %s365 = smul.addr %s364, 8
      %s366 = scalar_lea.vmem %s10, %s365
      %s367 = smul.u32 4, %s21
      %p368 = scmp.lt.s32.totalorder %s367, 7
      %s369 = scalar_select %p368, %s367, 7
      %s370 = smul.addr %s369, 8
      %s371 = scalar_lea.vmem %s0, %s370
      %s372 = smul.u32 4, %s21
      %s373 = smul.u32 4, %s21
      %p374 = scmp.lt.s32.totalorder %s373, 7
      %s375 = scalar_select %p374, %s373, 7
      %s376 = smul.addr %s375, 8
      %s377 = scalar_lea.vmem %s1, %s376
      %s378 = smul.u32 4, %s21
      %s379 = smul.u32 4, %s21
      %p380 = scmp.lt.s32.totalorder %s379, 7
      %s381 = scalar_select %p380, %s379, 7
      %s382 = smul.addr %s381, 8
      %s383 = scalar_lea.vmem %s10, %s382
      %s384 = smul.u32 4, %s21
      %v385 = vld [vmem:[%s371] sm:$0xff]
      %v386 = vld [vmem:[%s371 + $0x8] sm:$0xff]
      %v387 = vld [vmem:[%s371 + $0x10] sm:$0xff]
      %v388 = vld [vmem:[%s371 + $0x18] sm:$0xff]
      %v389 = vld [vmem:[%s377] sm:$0xff]
      %v390 = vld [vmem:[%s377 + $0x8] sm:$0xff]
      %v391 = vld [vmem:[%s377 + $0x10] sm:$0xff]
      %v392 = vld [vmem:[%s377 + $0x18] sm:$0xff]
      %v393 = vld [vmem:[%s3] sm:$0x1]
      %v394 = vld [vmem:[%s5] sm:$0x1]
      %v395 = vld [vmem:[%s9] sm:$0x1]
      %v396 = vld [vmem:[%s6] sm:$0x1]
      %v397 = vld [vmem:[%s7] sm:$0x1]
      %v398 = vld [vmem:[%s4] sm:$0xff]
      %v399 = vld [vmem:[%s4 + $0x8] sm:$0xff]
      %v400 = vld [vmem:[%s4 + $0x10] sm:$0xff]
      %v401 = vld [vmem:[%s4 + $0x18] sm:$0xff]
      %v402 = vld [vmem:[%s4 + $0x20] sm:$0xff]
      %v403 = vld [vmem:[%s4 + $0x28] sm:$0xff]
      %v404 = vld [vmem:[%s4 + $0x30] sm:$0xff]
      %v405 = vld [vmem:[%s4 + $0x38] sm:$0xff]
      %v406 = vld [vmem:[%s2] sm:$0xff]
      %v407 = vld [vmem:[%s2 + $0x8] sm:$0xff]
      %v408 = vld [vmem:[%s2 + $0x10] sm:$0xff]
      %v409 = vld [vmem:[%s2 + $0x18] sm:$0xff]
      %v411 = vlaneseq
      %v412 = vshrl.u32 %v411, 7
      %v413 = vsub.s32 0, %v412
      %v414 = vrot.slane %v393, %v413
      %vm416 = vcmask 261120
      %v418 = vsel %vm416, %v385, 0
      %v421 = vsel %vm416, %v386, 0
      %v424 = vsel %vm416, %v387, 0
      %v427 = vsel %vm416, %v388, 0
      %429 = vmatprep.subr.mxu0 0.0
      %430 = vmatpush1.msra.mxu0 %v406
      %431 = vmatprep.subr.mxu0 0.0
      %432 = vmatpush1.msra.mxu0 %v407
      %433 = vmatprep.subr.mxu0 0.0
      %434 = vmatpush1.msra.mxu0 %v408
      %435 = vmatprep.subr.mxu0 0.0
      %436 = vmatpush1.msra.mxu0 %v409
      %437 = vmatprep.subr.mxu0 0.0
      %438 = vmatpush1.msra.mxu0 0.0
      %439 = vmatprep.subr.mxu0 0.0
      %440 = vmatpush1.msra.mxu0 0.0
      %441 = vmatprep.subr.mxu0 0.0
      %442 = vmatpush1.msra.mxu0 0.0
      %443 = vmatprep.subr.mxu0 0.0
      %444 = vmatpush1.msra.mxu0 0.0
      %445 = vmatprep.subr.mxu0 0.0
      %446 = vmatpush1.msra.mxu0 0.0
      %447 = vmatprep.subr.mxu0 0.0
      %448 = vmatpush1.msra.mxu0 0.0
      %449 = vmatprep.subr.mxu0 0.0
      %450 = vmatpush1.msra.mxu0 0.0
      %451 = vmatprep.subr.mxu0 0.0
      %452 = vmatpush1.msra.mxu0 0.0
      %453 = vmatprep.subr.mxu0 0.0
      %454 = vmatpush1.msra.mxu0 0.0
      %455 = vmatprep.subr.mxu0 0.0
      %456 = vmatpush1.msra.mxu0 0.0
      %457 = vmatprep.subr.mxu0 0.0
      %458 = vmatpush1.msra.mxu0 0.0
      %459 = vmatprep.subr.mxu0 0.0
      %460 = vmatpush1.msra.mxu0 0.0
      %461 = vmatprep.subr.mxu0 0.0
      %462 = vmatpush1.msra.mxu0 0.0
      %463 = vmatprep.subr.mxu0 0.0
      %464 = vmatpush1.msra.mxu0 0.0
      %465 = vmatprep.subr.mxu0 0.0
      %466 = vmatpush1.msra.mxu0 0.0
      %467 = vmatprep.subr.mxu0 0.0
      %468 = vmatpush1.msra.mxu0 0.0
      %469 = vmatprep.subr.mxu0 0.0
      %470 = vmatpush1.msra.mxu0 0.0
      %471 = vmatprep.subr.mxu0 0.0
      %472 = vmatpush1.msra.mxu0 0.0
      %473 = vmatprep.subr.mxu0 0.0
      %474 = vmatpush1.msra.mxu0 0.0
      %475 = vmatprep.subr.mxu0 0.0
      %476 = vmatpush1.msra.mxu0 0.0
      %477 = vmatprep.subr.mxu0 0.0
      %478 = vmatpush1.msra.mxu0 0.0
      %479 = vmatprep.subr.mxu0 0.0
      %480 = vmatpush1.msra.mxu0 0.0
      %481 = vmatprep.subr.mxu0 0.0
      %482 = vmatpush1.msra.mxu0 0.0
      %483 = vmatprep.subr.mxu0 0.0
      %484 = vmatpush1.msra.mxu0 0.0
      %485 = vmatprep.subr.mxu0 0.0
      %486 = vmatpush1.msra.mxu0 0.0
      %487 = vmatprep.subr.mxu0 0.0
      %488 = vmatpush1.msra.mxu0 0.0
      %489 = vmatprep.subr.mxu0 0.0
      %490 = vmatpush1.msra.mxu0 0.0
      %491 = vmatprep.subr.mxu0 0.0
      %492 = vmatpush1.msra.mxu0 0.0
      %493 = vmatprep.mubr.f32.mxu0 0.0
      %494 = vmatmul.mubr.f32.gmra.mrb[0].mxu0 %v418
      %v495 = vpop.f32.mrb[0].mxu0
      %v496 = vadd.f32 %v414, %v495
      %v497 = vpop.f32.mrb[0].mxu0
      %498 = vmatprep.mubr.f32.mxu0 0.0
      %499 = vmatmul.mubr.f32.gmra.mrb[0].mxu0 %v421
      %v500 = vpop.f32.mrb[0].mxu0
      %v501 = vadd.f32 %v414, %v500
      %v502 = vpop.f32.mrb[0].mxu0
      %503 = vmatprep.mubr.f32.mxu0 0.0
      %504 = vmatmul.mubr.f32.gmra.mrb[0].mxu0 %v424
      %v505 = vpop.f32.mrb[0].mxu0
      %v506 = vadd.f32 %v414, %v505
      %v507 = vpop.f32.mrb[0].mxu0
      %508 = vmatprep.mubr.f32.mxu0 0.0
      %509 = vmatmul.mubr.f32.gmra.mrb[0].mxu0 %v427
      %v510 = vpop.f32.mrb[0].mxu0
      %v511 = vadd.f32 %v414, %v510
      %v512 = vpop.f32.mrb[0].mxu0
      %513 = vdwg.mxu0
      %v515 = vlaneseq
      %v516 = vshrl.u32 %v515, 7
      %v517 = vsub.s32 0, %v516
      %v518 = vrot.slane %v394, %v517
      %vm520 = vcmask 523264
      %v522 = vsel %vm520, %v496, 0
      %v525 = vsel %vm520, %v501, 0
      %v528 = vsel %vm520, %v506, 0
      %v531 = vsel %vm520, %v511, 0
      %533 = vmatprep.subr.mxu0 0.0
      %534 = vmatpush1.msra.mxu0 %v398
      %535 = vmatprep.subr.mxu0 0.0
      %536 = vmatpush1.msra.mxu0 %v399
      %537 = vmatprep.subr.mxu0 0.0
      %538 = vmatpush1.msra.mxu0 %v400
      %539 = vmatprep.subr.mxu0 0.0
      %540 = vmatpush1.msra.mxu0 %v401
      %541 = vmatprep.subr.mxu0 0.0
      %542 = vmatpush1.msra.mxu0 %v402
      %543 = vmatprep.subr.mxu0 0.0
      %544 = vmatpush1.msra.mxu0 %v403
      %545 = vmatprep.subr.mxu0 0.0
      %546 = vmatpush1.msra.mxu0 %v404
      %547 = vmatprep.subr.mxu0 0.0
      %548 = vmatpush1.msra.mxu0 %v405
      %549 = vmatprep.subr.mxu0 0.0
      %550 = vmatpush1.msra.mxu0 0.0
      %551 = vmatprep.subr.mxu0 0.0
      %552 = vmatpush1.msra.mxu0 0.0
      %553 = vmatprep.subr.mxu0 0.0
      %554 = vmatpush1.msra.mxu0 0.0
      %555 = vmatprep.subr.mxu0 0.0
      %556 = vmatpush1.msra.mxu0 0.0
      %557 = vmatprep.subr.mxu0 0.0
      %558 = vmatpush1.msra.mxu0 0.0
      %559 = vmatprep.subr.mxu0 0.0
      %560 = vmatpush1.msra.mxu0 0.0
      %561 = vmatprep.subr.mxu0 0.0
      %562 = vmatpush1.msra.mxu0 0.0
      %563 = vmatprep.subr.mxu0 0.0
      %564 = vmatpush1.msra.mxu0 0.0
      %565 = vmatprep.subr.mxu0 0.0
      %566 = vmatpush1.msra.mxu0 0.0
      %567 = vmatprep.subr.mxu0 0.0
      %568 = vmatpush1.msra.mxu0 0.0
      %569 = vmatprep.subr.mxu0 0.0
      %570 = vmatpush1.msra.mxu0 0.0
      %571 = vmatprep.subr.mxu0 0.0
      %572 = vmatpush1.msra.mxu0 0.0
      %573 = vmatprep.subr.mxu0 0.0
      %574 = vmatpush1.msra.mxu0 0.0
      %575 = vmatprep.subr.mxu0 0.0
      %576 = vmatpush1.msra.mxu0 0.0
      %577 = vmatprep.subr.mxu0 0.0
      %578 = vmatpush1.msra.mxu0 0.0
      %579 = vmatprep.subr.mxu0 0.0
      %580 = vmatpush1.msra.mxu0 0.0
      %581 = vmatprep.subr.mxu0 0.0
      %582 = vmatpush1.msra.mxu0 0.0
      %583 = vmatprep.subr.mxu0 0.0
      %584 = vmatpush1.msra.mxu0 0.0
      %585 = vmatprep.subr.mxu0 0.0
      %586 = vmatpush1.msra.mxu0 0.0
      %587 = vmatprep.subr.mxu0 0.0
      %588 = vmatpush1.msra.mxu0 0.0
      %589 = vmatprep.subr.mxu0 0.0
      %590 = vmatpush1.msra.mxu0 0.0
      %591 = vmatprep.subr.mxu0 0.0
      %592 = vmatpush1.msra.mxu0 0.0
      %593 = vmatprep.subr.mxu0 0.0
      %594 = vmatpush1.msra.mxu0 0.0
      %595 = vmatprep.subr.mxu0 0.0
      %596 = vmatpush1.msra.mxu0 0.0
      %597 = vmatprep.mubr.f32.mxu0 0.0
      %598 = vmatmul.mubr.f32.gmra.mrb[0].mxu0 %v522
      %v599 = vpop.f32.mrb[0].mxu0
      %v600 = vadd.f32 %v518, %v599
      %v601 = vpop.f32.mrb[0].mxu0
      %602 = vmatprep.mubr.f32.mxu0 0.0
      %603 = vmatmul.mubr.f32.gmra.mrb[0].mxu0 %v525
      %v604 = vpop.f32.mrb[0].mxu0
      %v605 = vadd.f32 %v518, %v604
      %v606 = vpop.f32.mrb[0].mxu0
      %607 = vmatprep.mubr.f32.mxu0 0.0
      %608 = vmatmul.mubr.f32.gmra.mrb[0].mxu0 %v528
      %v609 = vpop.f32.mrb[0].mxu0
      %v610 = vadd.f32 %v518, %v609
      %v611 = vpop.f32.mrb[0].mxu0
      %612 = vmatprep.mubr.f32.mxu0 0.0
      %613 = vmatmul.mubr.f32.gmra.mrb[0].mxu0 %v531
      %v614 = vpop.f32.mrb[0].mxu0
      %v615 = vadd.f32 %v518, %v614
      %v616 = vpop.f32.mrb[0].mxu0
      %617 = vdwg.mxu0
      %v618 = vsel %vm520, %v600, 0.0
      %619 = vadd.xlane.f32.xlu0 %v618
      %v620 = vpop.xlane.xlu0 %619
      %v621 = vsel %vm520, %v605, 0.0
      %622 = vadd.xlane.f32.xlu0 %v621
      %v623 = vpop.xlane.xlu0 %622
      %v624 = vsel %vm520, %v610, 0.0
      %625 = vadd.xlane.f32.xlu0 %v624
      %v626 = vpop.xlane.xlu0 %625
      %v627 = vsel %vm520, %v615, 0.0
      %628 = vadd.xlane.f32.xlu0 %v627
      %v629 = vpop.xlane.xlu0 %628
      %v630 = vmul.f32 %v620, 0.015625
      %v631 = vmul.f32 %v623, 0.015625
      %v632 = vmul.f32 %v626, 0.015625
      %v633 = vmul.f32 %v629, 0.015625
      %v634 = vmul.f32 %v600, %v600
      %v635 = vmul.f32 %v605, %v605
      %v636 = vmul.f32 %v610, %v610
      %v637 = vmul.f32 %v615, %v615
      %v638 = vsel %vm520, %v634, 0.0
      %639 = vadd.xlane.f32.xlu0 %v638
      %v640 = vpop.xlane.xlu0 %639
      %v641 = vsel %vm520, %v635, 0.0
      %642 = vadd.xlane.f32.xlu0 %v641
      %v643 = vpop.xlane.xlu0 %642
      %v644 = vsel %vm520, %v636, 0.0
      %645 = vadd.xlane.f32.xlu0 %v644
      %v646 = vpop.xlane.xlu0 %645
      %v647 = vsel %vm520, %v637, 0.0
      %648 = vadd.xlane.f32.xlu0 %v647
      %v649 = vpop.xlane.xlu0 %648
      %v650 = vmul.f32 %v640, 0.015625
      %v651 = vmul.f32 %v643, 0.015625
      %v652 = vmul.f32 %v646, 0.015625
      %v653 = vmul.f32 %v649, 0.015625
      %v654 = vmul.f32 %v630, %v630
      %v655 = vmul.f32 %v631, %v631
      %v656 = vmul.f32 %v632, %v632
      %v657 = vmul.f32 %v633, %v633
      %v658 = vsub.f32 %v650, %v654
      %v659 = vsub.f32 %v651, %v655
      %v660 = vsub.f32 %v652, %v656
      %v661 = vsub.f32 %v653, %v657
      %v662 = vmax.f32 %v658, 0.0
      %v663 = vmax.f32 %v659, 0.0
      %v664 = vmax.f32 %v660, 0.0
      %v665 = vmax.f32 %v661, 0.0
      %v666 = vsub.f32 %v600, %v630
      %v667 = vsub.f32 %v605, %v631
      %v668 = vsub.f32 %v610, %v632
      %v669 = vsub.f32 %v615, %v633
      %v670 = vadd.f32 %v662, 1e-05
      %v671 = vadd.f32 %v663, 1e-05
      %v672 = vadd.f32 %v664, 1e-05
      %v673 = vadd.f32 %v665, 1e-05
      %v674 = vrsqrt.pop %v670
      %v675 = vrsqrt.pop %v671
      %v676 = vrsqrt.pop %v672
      %v677 = vrsqrt.pop %v673
      %v678 = vmul.f32 %v666, %v674
      %v679 = vmul.f32 %v667, %v675
      %v680 = vmul.f32 %v668, %v676
      %v681 = vmul.f32 %v669, %v677
      %v683 = vlaneseq
      %v684 = vshrl.u32 %v683, 7
      %v685 = vsub.s32 0, %v684
      %v686 = vrot.slane %v396, %v685
      %v688 = vmul.f32 %v678, %v686
      %v689 = vmul.f32 %v679, %v686
      %v690 = vmul.f32 %v680, %v686
      %v691 = vmul.f32 %v681, %v686
      %v693 = vlaneseq
      %v694 = vshrl.u32 %v693, 7
      %v695 = vsub.s32 0, %v694
      %v696 = vrot.slane %v397, %v695
      %v698 = vadd.f32 %v688, %v696
      %v699 = vadd.f32 %v689, %v696
      %v700 = vadd.f32 %v690, %v696
      %v701 = vadd.f32 %v691, %v696
      %v702 = vmax.f32 %v698, 0.0
      %v703 = vmax.f32 %v699, 0.0
      %v704 = vmax.f32 %v700, 0.0
      %v705 = vmax.f32 %v701, 0.0
      %v706 = vadd.f32 %v496, %v702
      %v707 = vadd.f32 %v501, %v703
      %v708 = vadd.f32 %v506, %v704
      %v709 = vadd.f32 %v511, %v705
      %v710 = vmul.f32 %v706, %v389
      %v711 = vmul.f32 %v707, %v390
      %v712 = vmul.f32 %v708, %v391
      %v713 = vmul.f32 %v709, %v392
      %v715 = vsel %vm520, %v710, 0
      %v718 = vsel %vm520, %v711, 0
      %v721 = vsel %vm520, %v712, 0
      %v724 = vsel %vm520, %v713, 0
      %726 = vmatprep.subr.mxu0 0.0
      %727 = vmatpush1.msra.mxu0 %v398
      %728 = vmatprep.subr.mxu0 0.0
      %729 = vmatpush1.msra.mxu0 %v399
      %730 = vmatprep.subr.mxu0 0.0
      %731 = vmatpush1.msra.mxu0 %v400
      %732 = vmatprep.subr.mxu0 0.0
      %733 = vmatpush1.msra.mxu0 %v401
      %734 = vmatprep.subr.mxu0 0.0
      %735 = vmatpush1.msra.mxu0 %v402
      %736 = vmatprep.subr.mxu0 0.0
      %737 = vmatpush1.msra.mxu0 %v403
      %738 = vmatprep.subr.mxu0 0.0
      %739 = vmatpush1.msra.mxu0 %v404
      %740 = vmatprep.subr.mxu0 0.0
      %741 = vmatpush1.msra.mxu0 %v405
      %742 = vmatprep.subr.mxu0 0.0
      %743 = vmatpush1.msra.mxu0 0.0
      %744 = vmatprep.subr.mxu0 0.0
      %745 = vmatpush1.msra.mxu0 0.0
      %746 = vmatprep.subr.mxu0 0.0
      %747 = vmatpush1.msra.mxu0 0.0
      %748 = vmatprep.subr.mxu0 0.0
      %749 = vmatpush1.msra.mxu0 0.0
      %750 = vmatprep.subr.mxu0 0.0
      %751 = vmatpush1.msra.mxu0 0.0
      %752 = vmatprep.subr.mxu0 0.0
      %753 = vmatpush1.msra.mxu0 0.0
      %754 = vmatprep.subr.mxu0 0.0
      %755 = vmatpush1.msra.mxu0 0.0
      %756 = vmatprep.subr.mxu0 0.0
      %757 = vmatpush1.msra.mxu0 0.0
      %758 = vmatprep.subr.mxu0 0.0
      %759 = vmatpush1.msra.mxu0 0.0
      %760 = vmatprep.subr.mxu0 0.0
      %761 = vmatpush1.msra.mxu0 0.0
      %762 = vmatprep.subr.mxu0 0.0
      %763 = vmatpush1.msra.mxu0 0.0
      %764 = vmatprep.subr.mxu0 0.0
      %765 = vmatpush1.msra.mxu0 0.0
      %766 = vmatprep.subr.mxu0 0.0
      %767 = vmatpush1.msra.mxu0 0.0
      %768 = vmatprep.subr.mxu0 0.0
      %769 = vmatpush1.msra.mxu0 0.0
      %770 = vmatprep.subr.mxu0 0.0
      %771 = vmatpush1.msra.mxu0 0.0
      %772 = vmatprep.subr.mxu0 0.0
      %773 = vmatpush1.msra.mxu0 0.0
      %774 = vmatprep.subr.mxu0 0.0
      %775 = vmatpush1.msra.mxu0 0.0
      %776 = vmatprep.subr.mxu0 0.0
      %777 = vmatpush1.msra.mxu0 0.0
      %778 = vmatprep.subr.mxu0 0.0
      %779 = vmatpush1.msra.mxu0 0.0
      %780 = vmatprep.subr.mxu0 0.0
      %781 = vmatpush1.msra.mxu0 0.0
      %782 = vmatprep.subr.mxu0 0.0
      %783 = vmatpush1.msra.mxu0 0.0
      %784 = vmatprep.subr.mxu0 0.0
      %785 = vmatpush1.msra.mxu0 0.0
      %786 = vmatprep.subr.mxu0 0.0
      %787 = vmatpush1.msra.mxu0 0.0
      %788 = vmatprep.subr.mxu0 0.0
      %789 = vmatpush1.msra.mxu0 0.0
      %790 = vmatprep.mubr.f32.mxu0 0.0
      %791 = vmatmul.mubr.f32.gmra.mrb[0].mxu0 %v715
      %v792 = vpop.f32.mrb[0].mxu0
      %v793 = vadd.f32 %v518, %v792
      %v794 = vpop.f32.mrb[0].mxu0
      %795 = vmatprep.mubr.f32.mxu0 0.0
      %796 = vmatmul.mubr.f32.gmra.mrb[0].mxu0 %v718
      %v797 = vpop.f32.mrb[0].mxu0
      %v798 = vadd.f32 %v518, %v797
      %v799 = vpop.f32.mrb[0].mxu0
      %800 = vmatprep.mubr.f32.mxu0 0.0
      %801 = vmatmul.mubr.f32.gmra.mrb[0].mxu0 %v721
      %v802 = vpop.f32.mrb[0].mxu0
      %v803 = vadd.f32 %v518, %v802
      %v804 = vpop.f32.mrb[0].mxu0
      %805 = vmatprep.mubr.f32.mxu0 0.0
      %806 = vmatmul.mubr.f32.gmra.mrb[0].mxu0 %v724
      %v807 = vpop.f32.mrb[0].mxu0
      %v808 = vadd.f32 %v518, %v807
      %v809 = vpop.f32.mrb[0].mxu0
      %810 = vdwg.mxu0
      %v811 = vsel %vm520, %v793, 0.0
      %812 = vadd.xlane.f32.xlu0 %v811
      %v813 = vpop.xlane.xlu0 %812
      %v814 = vsel %vm520, %v798, 0.0
      %815 = vadd.xlane.f32.xlu0 %v814
      %v816 = vpop.xlane.xlu0 %815
      %v817 = vsel %vm520, %v803, 0.0
      %818 = vadd.xlane.f32.xlu0 %v817
      %v819 = vpop.xlane.xlu0 %818
      %v820 = vsel %vm520, %v808, 0.0
      %821 = vadd.xlane.f32.xlu0 %v820
      %v822 = vpop.xlane.xlu0 %821
      %v823 = vmul.f32 %v813, 0.015625
      %v824 = vmul.f32 %v816, 0.015625
      %v825 = vmul.f32 %v819, 0.015625
      %v826 = vmul.f32 %v822, 0.015625
      %v827 = vmul.f32 %v793, %v793
      %v828 = vmul.f32 %v798, %v798
      %v829 = vmul.f32 %v803, %v803
      %v830 = vmul.f32 %v808, %v808
      %v831 = vsel %vm520, %v827, 0.0
      %832 = vadd.xlane.f32.xlu0 %v831
      %v833 = vpop.xlane.xlu0 %832
      %v834 = vsel %vm520, %v828, 0.0
      %835 = vadd.xlane.f32.xlu0 %v834
      %v836 = vpop.xlane.xlu0 %835
      %v837 = vsel %vm520, %v829, 0.0
      %838 = vadd.xlane.f32.xlu0 %v837
      %v839 = vpop.xlane.xlu0 %838
      %v840 = vsel %vm520, %v830, 0.0
      %841 = vadd.xlane.f32.xlu0 %v840
      %v842 = vpop.xlane.xlu0 %841
      %v843 = vmul.f32 %v833, 0.015625
      %v844 = vmul.f32 %v836, 0.015625
      %v845 = vmul.f32 %v839, 0.015625
      %v846 = vmul.f32 %v842, 0.015625
      %v847 = vmul.f32 %v823, %v823
      %v848 = vmul.f32 %v824, %v824
      %v849 = vmul.f32 %v825, %v825
      %v850 = vmul.f32 %v826, %v826
      %v851 = vsub.f32 %v843, %v847
      %v852 = vsub.f32 %v844, %v848
      %v853 = vsub.f32 %v845, %v849
      %v854 = vsub.f32 %v846, %v850
      %v855 = vmax.f32 %v851, 0.0
      %v856 = vmax.f32 %v852, 0.0
      %v857 = vmax.f32 %v853, 0.0
      %v858 = vmax.f32 %v854, 0.0
      %v859 = vsub.f32 %v793, %v823
      %v860 = vsub.f32 %v798, %v824
      %v861 = vsub.f32 %v803, %v825
      %v862 = vsub.f32 %v808, %v826
      %v863 = vadd.f32 %v855, 1e-05
      %v864 = vadd.f32 %v856, 1e-05
      %v865 = vadd.f32 %v857, 1e-05
      %v866 = vadd.f32 %v858, 1e-05
      %v867 = vrsqrt.pop %v863
      %v868 = vrsqrt.pop %v864
      %v869 = vrsqrt.pop %v865
      %v870 = vrsqrt.pop %v866
      %v871 = vmul.f32 %v859, %v867
      %v872 = vmul.f32 %v860, %v868
      %v873 = vmul.f32 %v861, %v869
      %v874 = vmul.f32 %v862, %v870
      %v875 = vmul.f32 %v871, %v686
      %v876 = vmul.f32 %v872, %v686
      %v877 = vmul.f32 %v873, %v686
      %v878 = vmul.f32 %v874, %v686
      %v879 = vadd.f32 %v875, %v696
      %v880 = vadd.f32 %v876, %v696
      %v881 = vadd.f32 %v877, %v696
      %v882 = vadd.f32 %v878, %v696
      %v883 = vmax.f32 %v879, 0.0
      %v884 = vmax.f32 %v880, 0.0
      %v885 = vmax.f32 %v881, 0.0
      %v886 = vmax.f32 %v882, 0.0
      %v887 = vadd.f32 %v710, %v883
      %v888 = vadd.f32 %v711, %v884
      %v889 = vadd.f32 %v712, %v885
      %v890 = vadd.f32 %v713, %v886
      %v891 = vmul.f32 %v887, %v389
      %v892 = vmul.f32 %v888, %v390
      %v893 = vmul.f32 %v889, %v391
      %v894 = vmul.f32 %v890, %v392
      %v895 = vld [vmem:[%s8] sm:$0xff]
      %v896 = vld [vmem:[%s8 + $0x8] sm:$0xff]
      %v897 = vld [vmem:[%s8 + $0x10] sm:$0xff]
      %v898 = vld [vmem:[%s8 + $0x18] sm:$0xff]
      %v899 = vld [vmem:[%s8 + $0x20] sm:$0xff]
      %v900 = vld [vmem:[%s8 + $0x28] sm:$0xff]
      %v901 = vld [vmem:[%s8 + $0x30] sm:$0xff]
      %v902 = vld [vmem:[%s8 + $0x38] sm:$0xff]
      %v904 = vlaneseq
      %v905 = vshrl.u32 %v904, 7
      %v906 = vsub.s32 0, %v905
      %v907 = vrot.slane %v395, %v906
      %v910 = vsel %vm520, %v891, 0
      %v913 = vsel %vm520, %v892, 0
      %v916 = vsel %vm520, %v893, 0
      %v919 = vsel %vm520, %v894, 0
      %921 = vmatprep.subr.mxu0 0.0
      %922 = vmatpush1.msra.mxu0 %v895
      %923 = vmatprep.subr.mxu0 0.0
      %924 = vmatpush1.msra.mxu0 %v896
      %925 = vmatprep.subr.mxu0 0.0
      %926 = vmatpush1.msra.mxu0 %v897
      %927 = vmatprep.subr.mxu0 0.0
      %928 = vmatpush1.msra.mxu0 %v898
      %929 = vmatprep.subr.mxu0 0.0
      %930 = vmatpush1.msra.mxu0 %v899
      %931 = vmatprep.subr.mxu0 0.0
      %932 = vmatpush1.msra.mxu0 %v900
      %933 = vmatprep.subr.mxu0 0.0
      %934 = vmatpush1.msra.mxu0 %v901
      %935 = vmatprep.subr.mxu0 0.0
      %936 = vmatpush1.msra.mxu0 %v902
      %937 = vmatprep.subr.mxu0 0.0
      %938 = vmatpush1.msra.mxu0 0.0
      %939 = vmatprep.subr.mxu0 0.0
      %940 = vmatpush1.msra.mxu0 0.0
      %941 = vmatprep.subr.mxu0 0.0
      %942 = vmatpush1.msra.mxu0 0.0
      %943 = vmatprep.subr.mxu0 0.0
      %944 = vmatpush1.msra.mxu0 0.0
      %945 = vmatprep.subr.mxu0 0.0
      %946 = vmatpush1.msra.mxu0 0.0
      %947 = vmatprep.subr.mxu0 0.0
      %948 = vmatpush1.msra.mxu0 0.0
      %949 = vmatprep.subr.mxu0 0.0
      %950 = vmatpush1.msra.mxu0 0.0
      %951 = vmatprep.subr.mxu0 0.0
      %952 = vmatpush1.msra.mxu0 0.0
      %953 = vmatprep.subr.mxu0 0.0
      %954 = vmatpush1.msra.mxu0 0.0
      %955 = vmatprep.subr.mxu0 0.0
      %956 = vmatpush1.msra.mxu0 0.0
      %957 = vmatprep.subr.mxu0 0.0
      %958 = vmatpush1.msra.mxu0 0.0
      %959 = vmatprep.subr.mxu0 0.0
      %960 = vmatpush1.msra.mxu0 0.0
      %961 = vmatprep.subr.mxu0 0.0
      %962 = vmatpush1.msra.mxu0 0.0
      %963 = vmatprep.subr.mxu0 0.0
      %964 = vmatpush1.msra.mxu0 0.0
      %965 = vmatprep.subr.mxu0 0.0
      %966 = vmatpush1.msra.mxu0 0.0
      %967 = vmatprep.subr.mxu0 0.0
      %968 = vmatpush1.msra.mxu0 0.0
      %969 = vmatprep.subr.mxu0 0.0
      %970 = vmatpush1.msra.mxu0 0.0
      %971 = vmatprep.subr.mxu0 0.0
      %972 = vmatpush1.msra.mxu0 0.0
      %973 = vmatprep.subr.mxu0 0.0
      %974 = vmatpush1.msra.mxu0 0.0
      %975 = vmatprep.subr.mxu0 0.0
      %976 = vmatpush1.msra.mxu0 0.0
      %977 = vmatprep.subr.mxu0 0.0
      %978 = vmatpush1.msra.mxu0 0.0
      %979 = vmatprep.subr.mxu0 0.0
      %980 = vmatpush1.msra.mxu0 0.0
      %981 = vmatprep.subr.mxu0 0.0
      %982 = vmatpush1.msra.mxu0 0.0
      %983 = vmatprep.subr.mxu0 0.0
      %984 = vmatpush1.msra.mxu0 0.0
      %985 = vmatprep.mubr.f32.mxu0 0.0
      %986 = vmatmul.mubr.f32.gmra.mrb[0].mxu0 %v910
      %v987 = vpop.f32.mrb[0].mxu0
      %v988 = vadd.f32 %v907, %v987
      %v989 = vpop.f32.mrb[0].mxu0
      %990 = vmatprep.mubr.f32.mxu0 0.0
      %991 = vmatmul.mubr.f32.gmra.mrb[0].mxu0 %v913
      %v992 = vpop.f32.mrb[0].mxu0
      %v993 = vadd.f32 %v907, %v992
      %v994 = vpop.f32.mrb[0].mxu0
      %995 = vmatprep.mubr.f32.mxu0 0.0
      %996 = vmatmul.mubr.f32.gmra.mrb[0].mxu0 %v916
      %v997 = vpop.f32.mrb[0].mxu0
      %v998 = vadd.f32 %v907, %v997
      %v999 = vpop.f32.mrb[0].mxu0
      %1000 = vmatprep.mubr.f32.mxu0 0.0
      %1001 = vmatmul.mubr.f32.gmra.mrb[0].mxu0 %v919
      %v1002 = vpop.f32.mrb[0].mxu0
      %v1003 = vadd.f32 %v907, %v1002
      %v1004 = vpop.f32.mrb[0].mxu0
      %1005 = vdwg.mxu0
      %vm1006 = vcmask 130048
      %1007 = vst.msk [vmem:[%s383] sm:$0xff] %vm1006, %v988
      %1008 = vst.msk [vmem:[%s383 + $0x8] sm:$0xff] %vm1006, %v993
      %1009 = vst.msk [vmem:[%s383 + $0x10] sm:$0xff] %vm1006, %v998
      %1010 = vst.msk [vmem:[%s383 + $0x18] sm:$0xff] %vm1006, %v1003
      %s1011 = smul.u32 4, %s21
      %p1012 = scmp.lt.s32.totalorder %s1011, 7
      %s1013 = scalar_select %p1012, %s1011, 7
      %s1014 = smul.addr %s1013, 8
      %s1015 = scalar_lea.vmem %s10, %s1014
      // Predicated region
      $region61: #{tpu_custom_call.1} parent=59 // pred_check
        %p1016 = pneg %p259
      $region62: #{tpu_custom_call.1} parent=59 // pred_check_branch
        %1018 = sbr.rel (%p1016) target = $region64
      $region63: #{tpu_custom_call.1} parent=59 // pred_region
        %s1019 = smul.u32 4, %s21
      $region64: #{tpu_custom_call.1} parent=59 // pred_fallthru
        _
    $region60: #{tpu_custom_call.1} parent=5 // pred_fallthru
      _
    %p1020 = scmp.le.s32.totalorder 2, %s16
    // Predicated region
    $region65: #{tpu_custom_call.1} parent=5 // pred_check
      %p1021 = pneg %p1020
    $region66: #{tpu_custom_call.1} parent=5 // pred_check_branch
      %1023 = sbr.rel (%p1021) target = $region68
    $region67: #{tpu_custom_call.1} parent=5 // pred_region
      %s1024 = ssub.s32 %s16, 2
      // Predicated region
      $region69: #{tpu_custom_call.1} parent=67 // pred_check
        %p1025 = pneg %p265
      $region70: #{tpu_custom_call.1} parent=67 // pred_check_branch
        %1027 = sbr.rel (%p1025) target = $region72
      $region71: #{tpu_custom_call.1} parent=67 // pred_region
        %s1028 = smul.u32 4, %s22
        %p1029 = scmp.lt.s32.totalorder %s1028, 7
        %s1030 = scalar_select %p1029, %s1028, 7
        %s1031 = smul.addr %s1030, 8
        %s1032 = scalar_lea.vmem %s10, %s1031
      $region72: #{tpu_custom_call.1} parent=67 // pred_fallthru
        _
    $region68: #{tpu_custom_call.1} parent=5 // pred_fallthru
      _
  $region6: #{tpu_custom_call.1} parent=0 // loop_footer
    %s20 = sadd.s32 1, %s16
  $region7: #{tpu_custom_call.1} parent=0 // loop_footer_branch
    %15 = sbr.rel target = $region3
  $region8: #{tpu_custom_call.1} parent=0 // loop_exit
    _

</llo_original>
